<compile_context>
chip_gen: v7x
topology: tpu7x:2x2x1
jax: 0.10.0
libtpu: 0.0.40
codegen_flags: <defaults>
</compile_context>

<pallas_src>
import jax
import jax.numpy as jnp
from jax.experimental import pallas as pl
from jax.experimental.pallas import tpu as pltpu

BN_EPS = 1e-5
LANE = 128


def _round_up(n, m):
    return ((n + m - 1) // m) * m


def _fused_net_kernel(x_ref,
                      w1_ref, gb1_ref,
                      w2_ref, gb2_ref,
                      w3_ref, gb3_ref,
                      o_ref):
    """Whole 3-layer net in one kernel; all operands resident in VMEM.

    Each layer: h = a @ W (Linear bias cancelled by BN); BatchNorm1d with
    training-mode (biased) batch statistics folded into a per-feature
    scale/shift; ReLU. gb_ref packs [gamma; beta] as a (2, d) array.
    """
    inv_b = 1.0 / x_ref.shape[0]

    def layer(a, w_ref, gb_ref):
        # MXU matmul with f32 accumulation.
        h = jnp.dot(a, w_ref[...], preferred_element_type=jnp.float32)
        # Single-pass batch stats: mean = E[h], var = E[h^2] - mean^2.
        mean = jnp.sum(h, axis=0, keepdims=True) * inv_b        # (1, d)
        ex2 = jnp.sum(h * h, axis=0, keepdims=True) * inv_b     # (1, d)
        var = jnp.maximum(ex2 - mean * mean, 0.0)               # guard cancellation
        inv_std = jax.lax.rsqrt(var + BN_EPS)                   # EUP
        gamma = gb_ref[0:1, :]                                   # (1, d)
        beta = gb_ref[1:2, :]                                    # (1, d)
        # Fold BN into a single scale/shift on the (B, d) tile.
        scale = gamma * inv_std
        shift = beta - mean * scale
        return jnp.maximum(h * scale + shift, 0.0)

    a1 = layer(x_ref[...], w1_ref, gb1_ref)
    a2 = layer(a1, w2_ref, gb2_ref)
    a3 = layer(a2, w3_ref, gb3_ref)
    o_ref[...] = a3.astype(o_ref.dtype)


def prepare_kernel_params(params):
    """One-time (outside the per-call path) padding + packing of parameters.

    * Hidden feature dims (layer 1/2 outputs) are zero-padded to 128 lanes so
      the in-kernel intermediates are lane-dense; padded gamma/beta lanes are
      zero, which keeps padded columns exactly 0 after BN + ReLU.
    * The last layer keeps its true output width so the kernel emits the final
      (B, out_dim3) result directly (no post-kernel slice).
    * x is NOT padded, so W1 needs no zero K rows; W2/W3 get zero K rows that
      line up with the padded (zero) columns of the previous activation.
    * Linear biases are dropped: training-mode BN cancels them exactly.
    """
    (w1, _b1, g1, bt1), (w2, _b2, g2, bt2), (w3, _b3, g3, bt3) = params
    in_dim, d1 = w1.shape
    d2, d3 = w2.shape[1], w3.shape[1]
    d1_p, d2_p = _round_up(d1, LANE), _round_up(d2, LANE)

    def pad2d(w, rows, cols):
        return jnp.pad(w, ((0, rows - w.shape[0]), (0, cols - w.shape[1])))

    def pack_gb(g, b, d_pad):
        gb = jnp.concatenate([g.reshape(1, -1), b.reshape(1, -1)], axis=0)
        return jnp.pad(gb, ((0, 0), (0, d_pad - gb.shape[1])))

    w1_k = pad2d(w1, in_dim, d1_p)   # pad N only (x unpadded along K)
    w2_k = pad2d(w2, d1_p, d2_p)     # zero K rows for padded a1 lanes
    w3_k = pad2d(w3, d2_p, d3)       # true output width: no final slice needed
    gb1 = pack_gb(g1, bt1, d1_p)
    gb2 = pack_gb(g2, bt2, d2_p)
    gb3 = pack_gb(g3, bt3, d3)
    return ((w1_k, gb1), (w2_k, gb2), (w3_k, gb3))


@jax.jit
def linear_net_forward(x, kernel_params):
    """Single fused pallas_call; no per-call padding / slicing XLA ops."""
    (w1, gb1), (w2, gb2), (w3, gb3) = kernel_params
    B = x.shape[0]
    d3 = w3.shape[1]
    vmem = pl.BlockSpec(memory_space=pltpu.VMEM)
    return pl.pallas_call(
        _fused_net_kernel,
        out_shape=jax.ShapeDtypeStruct((B, d3), jnp.float32),
        in_specs=[vmem] * 7,
        out_specs=vmem,
    )(x, w1, gb1, w2, gb2, w3, gb3)


def init_linear_net_params(key, in_dim, out_dim1, out_dim2, out_dim3):
    """Deterministic parameter init for the three Linear + BatchNorm1d blocks."""
    params = []
    dims = [(in_dim, out_dim1), (out_dim1, out_dim2), (out_dim2, out_dim3)]
    for (d_in, d_out) in dims:
        key, kw, kb = jax.random.split(key, 3)
        bound = 1.0 / jnp.sqrt(d_in)
        w = jax.random.uniform(kw, (d_in, d_out), jnp.float32, -bound, bound)
        b = jax.random.uniform(kb, (1, d_out), jnp.float32, -bound, bound)
        gamma = jnp.ones((1, d_out), jnp.float32)   # BatchNorm1d weight init
        beta = jnp.zeros((1, d_out), jnp.float32)   # BatchNorm1d bias init
        params.append((w, b, gamma, beta))
    return params


def _reference_forward(x, params):
    """Pure-JAX reference (training-mode BN, with the Linear bias included)."""
    for (w, b, gamma, beta) in params:
        h = x @ w + b
        mean = h.mean(axis=0, keepdims=True)
        var = ((h - mean) ** 2).mean(axis=0, keepdims=True)
        y = (h - mean) / jnp.sqrt(var + BN_EPS) * gamma + beta
        x = jnp.maximum(y, 0.0)
    return x


if __name__ == "__main__":
    # Small shapes consistent with the module: x is (batch, in_dim).
    B, in_dim, out_dim1, out_dim2, out_dim3 = 8, 32, 64, 48, 16

    key = jax.random.PRNGKey(0)
    key, kx = jax.random.split(key)
    x = jax.random.normal(kx, (B, in_dim), jnp.float32)

    params = init_linear_net_params(key, in_dim, out_dim1, out_dim2, out_dim3)
    # One-time preparation of padded/packed kernel operands (hoisted out of the
    # per-call path per the performance review).
    kernel_params = prepare_kernel_params(params)
    kernel_params = jax.block_until_ready(kernel_params)

    out = linear_net_forward(x, kernel_params)
    out = jax.block_until_ready(out)

    ref = _reference_forward(x, params)
    assert out.shape == (B, out_dim3)
    # Bias is dropped inside the kernel (BN cancels it exactly); the
    # E[h^2]-mean^2 variance rewrite and bias drop leave only float rounding
    # differences vs. the bias-including reference.
    assert jnp.allclose(out, ref, atol=1e-4, rtol=1e-4), "mismatch vs reference"

    print("KERNEL_OK")
</pallas_src>

<mosaic_0001>
module attributes {stable_mosaic.version = 11 : i64} {
  func.func @_fused_net_kernel(%arg0: memref<8x32xf32, #tpu.memory_space<vmem>>, %arg1: memref<32x128xf32, #tpu.memory_space<vmem>>, %arg2: memref<2x128xf32, #tpu.memory_space<vmem>>, %arg3: memref<128x128xf32, #tpu.memory_space<vmem>>, %arg4: memref<2x128xf32, #tpu.memory_space<vmem>>, %arg5: memref<128x16xf32, #tpu.memory_space<vmem>>, %arg6: memref<2x16xf32, #tpu.memory_space<vmem>>, %arg7: memref<8x16xf32, #tpu.memory_space<vmem>>) attributes {dimension_semantics = [], scalar_prefetch = 0 : i64, scratch_operands = 0 : i64, tpu.core_type = #tpu.core_type<tc>} {
    %c0 = arith.constant 0 : index
    %c0_0 = arith.constant 0 : index
    %0 = vector.load %arg0[%c0, %c0_0] : memref<8x32xf32, #tpu.memory_space<vmem>>, vector<8x32xf32>
    %c0_1 = arith.constant 0 : index
    %c0_2 = arith.constant 0 : index
    %1 = vector.load %arg1[%c0_1, %c0_2] : memref<32x128xf32, #tpu.memory_space<vmem>>, vector<32x128xf32>
    %cst = arith.constant dense<0.000000e+00> : vector<8x128xf32>
    %2 = tpu.matmul %0, %1, %cst {dimension_numbers = #tpu.dot_dimension_numbers<[1], [0], [0], [1], [0, 0, 1, 1], [], []>} : vector<8x32xf32>, vector<32x128xf32>, vector<8x128xf32> -> vector<8x128xf32>
    %cst_3 = arith.constant dense<0.000000e+00> : vector<128xf32>
    %3 = vector.multi_reduction <add>, %2, %cst_3 [0] : vector<8x128xf32> to vector<128xf32>
    %4 = vector.shape_cast %3 : vector<128xf32> to vector<1x128xf32>
    %cst_4 = arith.constant 1.250000e-01 : f32
    %5 = vector.broadcast %cst_4 : f32 to vector<1x128xf32>
    %6 = arith.mulf %4, %5 : vector<1x128xf32>
    %7 = arith.mulf %2, %2 : vector<8x128xf32>
    %cst_5 = arith.constant dense<0.000000e+00> : vector<128xf32>
    %8 = vector.multi_reduction <add>, %7, %cst_5 [0] : vector<8x128xf32> to vector<128xf32>
    %9 = vector.shape_cast %8 : vector<128xf32> to vector<1x128xf32>
    %cst_6 = arith.constant 1.250000e-01 : f32
    %10 = vector.broadcast %cst_6 : f32 to vector<1x128xf32>
    %11 = arith.mulf %9, %10 : vector<1x128xf32>
    %12 = arith.mulf %6, %6 : vector<1x128xf32>
    %13 = arith.subf %11, %12 : vector<1x128xf32>
    %cst_7 = arith.constant 0.000000e+00 : f32
    %14 = vector.broadcast %cst_7 : f32 to vector<1x128xf32>
    %15 = arith.maximumf %13, %14 : vector<1x128xf32>
    %cst_8 = arith.constant 9.99999974E-6 : f32
    %16 = vector.broadcast %cst_8 : f32 to vector<1x128xf32>
    %17 = arith.addf %15, %16 : vector<1x128xf32>
    %18 = math.rsqrt %17 : vector<1x128xf32>
    %c0_9 = arith.constant 0 : index
    %c0_10 = arith.constant 0 : index
    %19 = vector.load %arg2[%c0_9, %c0_10] : memref<2x128xf32, #tpu.memory_space<vmem>>, vector<1x128xf32>
    %c1 = arith.constant 1 : index
    %c0_11 = arith.constant 0 : index
    %20 = vector.load %arg2[%c1, %c0_11] : memref<2x128xf32, #tpu.memory_space<vmem>>, vector<1x128xf32>
    %21 = arith.mulf %19, %18 : vector<1x128xf32>
    %22 = arith.mulf %6, %21 : vector<1x128xf32>
    %23 = arith.subf %20, %22 : vector<1x128xf32>
    %24 = vector.broadcast %21 : vector<1x128xf32> to vector<8x128xf32>
    %25 = arith.mulf %2, %24 : vector<8x128xf32>
    %26 = vector.broadcast %23 : vector<1x128xf32> to vector<8x128xf32>
    %27 = arith.addf %25, %26 : vector<8x128xf32>
    %cst_12 = arith.constant 0.000000e+00 : f32
    %28 = vector.broadcast %cst_12 : f32 to vector<8x128xf32>
    %29 = arith.maximumf %27, %28 : vector<8x128xf32>
    %c0_13 = arith.constant 0 : index
    %c0_14 = arith.constant 0 : index
    %30 = vector.load %arg3[%c0_13, %c0_14] : memref<128x128xf32, #tpu.memory_space<vmem>>, vector<128x128xf32>
    %cst_15 = arith.constant dense<0.000000e+00> : vector<8x128xf32>
    %31 = tpu.matmul %29, %30, %cst_15 {dimension_numbers = #tpu.dot_dimension_numbers<[1], [0], [0], [1], [0, 0, 1, 1], [], []>} : vector<8x128xf32>, vector<128x128xf32>, vector<8x128xf32> -> vector<8x128xf32>
    %cst_16 = arith.constant dense<0.000000e+00> : vector<128xf32>
    %32 = vector.multi_reduction <add>, %31, %cst_16 [0] : vector<8x128xf32> to vector<128xf32>
    %33 = vector.shape_cast %32 : vector<128xf32> to vector<1x128xf32>
    %cst_17 = arith.constant 1.250000e-01 : f32
    %34 = vector.broadcast %cst_17 : f32 to vector<1x128xf32>
    %35 = arith.mulf %33, %34 : vector<1x128xf32>
    %36 = arith.mulf %31, %31 : vector<8x128xf32>
    %cst_18 = arith.constant dense<0.000000e+00> : vector<128xf32>
    %37 = vector.multi_reduction <add>, %36, %cst_18 [0] : vector<8x128xf32> to vector<128xf32>
    %38 = vector.shape_cast %37 : vector<128xf32> to vector<1x128xf32>
    %cst_19 = arith.constant 1.250000e-01 : f32
    %39 = vector.broadcast %cst_19 : f32 to vector<1x128xf32>
    %40 = arith.mulf %38, %39 : vector<1x128xf32>
    %41 = arith.mulf %35, %35 : vector<1x128xf32>
    %42 = arith.subf %40, %41 : vector<1x128xf32>
    %cst_20 = arith.constant 0.000000e+00 : f32
    %43 = vector.broadcast %cst_20 : f32 to vector<1x128xf32>
    %44 = arith.maximumf %42, %43 : vector<1x128xf32>
    %cst_21 = arith.constant 9.99999974E-6 : f32
    %45 = vector.broadcast %cst_21 : f32 to vector<1x128xf32>
    %46 = arith.addf %44, %45 : vector<1x128xf32>
    %47 = math.rsqrt %46 : vector<1x128xf32>
    %c0_22 = arith.constant 0 : index
    %c0_23 = arith.constant 0 : index
    %48 = vector.load %arg4[%c0_22, %c0_23] : memref<2x128xf32, #tpu.memory_space<vmem>>, vector<1x128xf32>
    %c1_24 = arith.constant 1 : index
    %c0_25 = arith.constant 0 : index
    %49 = vector.load %arg4[%c1_24, %c0_25] : memref<2x128xf32, #tpu.memory_space<vmem>>, vector<1x128xf32>
    %50 = arith.mulf %48, %47 : vector<1x128xf32>
    %51 = arith.mulf %35, %50 : vector<1x128xf32>
    %52 = arith.subf %49, %51 : vector<1x128xf32>
    %53 = vector.broadcast %50 : vector<1x128xf32> to vector<8x128xf32>
    %54 = arith.mulf %31, %53 : vector<8x128xf32>
    %55 = vector.broadcast %52 : vector<1x128xf32> to vector<8x128xf32>
    %56 = arith.addf %54, %55 : vector<8x128xf32>
    %cst_26 = arith.constant 0.000000e+00 : f32
    %57 = vector.broadcast %cst_26 : f32 to vector<8x128xf32>
    %58 = arith.maximumf %56, %57 : vector<8x128xf32>
    %c0_27 = arith.constant 0 : index
    %c0_28 = arith.constant 0 : index
    %59 = vector.load %arg5[%c0_27, %c0_28] : memref<128x16xf32, #tpu.memory_space<vmem>>, vector<128x16xf32>
    %cst_29 = arith.constant dense<0.000000e+00> : vector<8x16xf32>
    %60 = tpu.matmul %58, %59, %cst_29 {dimension_numbers = #tpu.dot_dimension_numbers<[1], [0], [0], [1], [0, 0, 1, 1], [], []>} : vector<8x128xf32>, vector<128x16xf32>, vector<8x16xf32> -> vector<8x16xf32>
    %cst_30 = arith.constant dense<0.000000e+00> : vector<16xf32>
    %61 = vector.multi_reduction <add>, %60, %cst_30 [0] : vector<8x16xf32> to vector<16xf32>
    %62 = vector.shape_cast %61 : vector<16xf32> to vector<1x16xf32>
    %cst_31 = arith.constant 1.250000e-01 : f32
    %63 = vector.broadcast %cst_31 : f32 to vector<1x16xf32>
    %64 = arith.mulf %62, %63 : vector<1x16xf32>
    %65 = arith.mulf %60, %60 : vector<8x16xf32>
    %cst_32 = arith.constant dense<0.000000e+00> : vector<16xf32>
    %66 = vector.multi_reduction <add>, %65, %cst_32 [0] : vector<8x16xf32> to vector<16xf32>
    %67 = vector.shape_cast %66 : vector<16xf32> to vector<1x16xf32>
    %cst_33 = arith.constant 1.250000e-01 : f32
    %68 = vector.broadcast %cst_33 : f32 to vector<1x16xf32>
    %69 = arith.mulf %67, %68 : vector<1x16xf32>
    %70 = arith.mulf %64, %64 : vector<1x16xf32>
    %71 = arith.subf %69, %70 : vector<1x16xf32>
    %cst_34 = arith.constant 0.000000e+00 : f32
    %72 = vector.broadcast %cst_34 : f32 to vector<1x16xf32>
    %73 = arith.maximumf %71, %72 : vector<1x16xf32>
    %cst_35 = arith.constant 9.99999974E-6 : f32
    %74 = vector.broadcast %cst_35 : f32 to vector<1x16xf32>
    %75 = arith.addf %73, %74 : vector<1x16xf32>
    %76 = math.rsqrt %75 : vector<1x16xf32>
    %c0_36 = arith.constant 0 : index
    %c0_37 = arith.constant 0 : index
    %77 = vector.load %arg6[%c0_36, %c0_37] : memref<2x16xf32, #tpu.memory_space<vmem>>, vector<1x16xf32>
    %c1_38 = arith.constant 1 : index
    %c0_39 = arith.constant 0 : index
    %78 = vector.load %arg6[%c1_38, %c0_39] : memref<2x16xf32, #tpu.memory_space<vmem>>, vector<1x16xf32>
    %79 = arith.mulf %77, %76 : vector<1x16xf32>
    %80 = arith.mulf %64, %79 : vector<1x16xf32>
    %81 = arith.subf %78, %80 : vector<1x16xf32>
    %82 = vector.broadcast %79 : vector<1x16xf32> to vector<8x16xf32>
    %83 = arith.mulf %60, %82 : vector<8x16xf32>
    %84 = vector.broadcast %81 : vector<1x16xf32> to vector<8x16xf32>
    %85 = arith.addf %83, %84 : vector<8x16xf32>
    %cst_40 = arith.constant 0.000000e+00 : f32
    %86 = vector.broadcast %cst_40 : f32 to vector<8x16xf32>
    %87 = arith.maximumf %85, %86 : vector<8x16xf32>
    %c0_41 = arith.constant 0 : index
    %c0_42 = arith.constant 0 : index
    %88 = vector.load %arg7[%c0_41, %c0_42] : memref<8x16xf32, #tpu.memory_space<vmem>>, vector<8x16xf32>
    tpu.vector_store %arg7[%c0_41, %c0_42], %87 {strides = array<i32>} : memref<8x16xf32, #tpu.memory_space<vmem>>, vector<8x16xf32>,
    return
  }
}

</mosaic_0001>

<llo_original>
// kernel: linear_net_forward.1
$region0: #{linear_net_forward.1}
  #allocation0 [shape = 'u32[]', space=smem, size = 0x4, offset = 0x4, fixed_abs, tag = 'smem constant byte address 0x4 - core index']
  #allocation1 [shape = 'u32[144,128]{1,0:T(1,128)}', space=vmem, size = 0x12000, scoped, tag = 'internal scratch']
  %s0 = inlined_call_operand.vmem [shape: f32[8,32], index: 0, kind: input, shape index: {}]
  %s1 = inlined_call_operand.hbm [shape: f32[32,128], index: 1, kind: input, shape index: {}]
  %s2 = inlined_call_operand.vmem [shape: f32[2,128], index: 2, kind: input, shape index: {}]
  %s3 = inlined_call_operand.vmem [shape: f32[128,128], index: 3, kind: input, shape index: {}]
  %s4 = inlined_call_operand.vmem [shape: f32[2,128], index: 4, kind: input, shape index: {}]
  %s5 = inlined_call_operand.vmem [shape: f32[128,16], index: 5, kind: input, shape index: {}]
  %s6 = inlined_call_operand.vmem [shape: f32[2,16], index: 6, kind: input, shape index: {}]
  %s7 = inlined_call_operand.hbm [shape: f32[8,16], index: 7, kind: output, shape index: {}]
  %s8 = sld [smem:[#allocation0]]
  $region42: #{linear_net_forward.1} parent=0
    _
  %s10 = ssub.s32 1, %s8
  %s11 = scalar_select 0, %s10, %s8
  $region1: #{linear_net_forward.1} parent=0
    #allocation2 [shape = 'u8[16384]{0}', space=vmem, size = 0x4000, scoped, tag = 'input window, operand 1, single buffered']
    #allocation3 [shape = 's32[1]{0}', space=sflag, size = 0x4, scoped, tag = 'scoped memory for linear_net_forward.1']
    #allocation4 [shape = 's32[1]{0}', space=sflag, size = 0x4, scoped, tag = 'scoped memory for linear_net_forward.1']
    #allocation5 [shape = 'u8[4096]{0}', space=vmem, size = 0x1000, scoped, tag = 'output window, operand 0, single buffered']
    %12 = vsyncpa [#allocation3], 0
    %13 = vsyncpa [#allocation4], 0
    // Predicated region
    $region2: #{linear_net_forward.1} parent=1 // pred_check
      _
    $region3: #{linear_net_forward.1} parent=1 // pred_check_branch
      %15 = sbr.rel (0) target = $region5
    $region4: #{linear_net_forward.1} parent=1 // pred_region
      _
    $region5: #{linear_net_forward.1} parent=1 // pred_fallthru
      _
    // Predicated region
    $region6: #{linear_net_forward.1} parent=1 // pred_check
      _
    $region7: #{linear_net_forward.1} parent=1 // pred_check_branch
      %17 = sbr.rel (0) target = $region9
    $region8: #{linear_net_forward.1} parent=1 // pred_region
      %s19 = ssub.s32 512, 512
      %20 = vsyncadd [#allocation3], %s19
      %s21 = sshll.u32 [#allocation2], 4
      %s22 = int_to_ptr.vmem [resolvable:$true] %s21
      %27 = dma.hbm_to_vmem [thread:$0]  %s1, 512, %s22, [#allocation3], 128, 128, 8
    $region9: #{linear_net_forward.1} parent=1 // pred_fallthru
      _
    // Predicated region
    $region10: #{linear_net_forward.1} parent=1 // pred_check
      _
    $region11: #{linear_net_forward.1} parent=1 // pred_check_branch
      %29 = sbr.rel (0) target = $region13
    $region12: #{linear_net_forward.1} parent=1 // pred_region
      _
    $region13: #{linear_net_forward.1} parent=1 // pred_fallthru
      _
    // Predicated region
    $region14: #{linear_net_forward.1} parent=1 // pred_check
      _
    $region15: #{linear_net_forward.1} parent=1 // pred_check_branch
      %31 = sbr.rel (0) target = $region17
    $region16: #{linear_net_forward.1} parent=1 // pred_region
      _
    $region17: #{linear_net_forward.1} parent=1 // pred_fallthru
      _
    // Predicated region
    $region18: #{linear_net_forward.1} parent=1 // pred_check
      _
    $region19: #{linear_net_forward.1} parent=1 // pred_check_branch
      %33 = sbr.rel (0) target = $region21
    $region20: #{linear_net_forward.1} parent=1 // pred_region
      _
    $region21: #{linear_net_forward.1} parent=1 // pred_fallthru
      _
    // Predicated region
    $region22: #{linear_net_forward.1} parent=1 // pred_check
      _
    $region23: #{linear_net_forward.1} parent=1 // pred_check_branch
      %35 = sbr.rel (0) target = $region25
    $region24: #{linear_net_forward.1} parent=1 // pred_region
      _
    $region25: #{linear_net_forward.1} parent=1 // pred_fallthru
      _
    // Predicated region
    $region26: #{linear_net_forward.1} parent=1 // pred_check
      _
    $region27: #{linear_net_forward.1} parent=1 // pred_check_branch
      %37 = sbr.rel (0) target = $region29
    $region28: #{linear_net_forward.1} parent=1 // pred_region
      _
    $region29: #{linear_net_forward.1} parent=1 // pred_fallthru
      _
    // Predicated region
    $region30: #{linear_net_forward.1} parent=1 // pred_check
      _
    $region31: #{linear_net_forward.1} parent=1 // pred_check_branch
      %39 = sbr.rel (0) target = $region33
    $region32: #{linear_net_forward.1} parent=1 // pred_region
      %40 = dma.done [#allocation3], 512
    $region33: #{linear_net_forward.1} parent=1 // pred_fallthru
      _
    %v41 = vld [vmem:[%s0] sm:$0xff]
    %v42 = vld [vmem:[#allocation2] sm:$0xff]
    %v43 = vld [vmem:[#allocation2 + $0x8] sm:$0xff]
    %v44 = vld [vmem:[#allocation2 + $0x10] sm:$0xff]
    %v45 = vld [vmem:[#allocation2 + $0x18] sm:$0xff]
    %vm46 = vcmask 261120
    %v48 = vsel %vm46, %v41, 0
    %50 = vmatprep.subr.mxu0 0.0
    %51 = vmatpush1.msra.mxu0 %v42
    %52 = vmatprep.subr.mxu0 0.0
    %53 = vmatpush1.msra.mxu0 %v43
    %54 = vmatprep.subr.mxu0 0.0
    %55 = vmatpush1.msra.mxu0 %v44
    %56 = vmatprep.subr.mxu0 0.0
    %57 = vmatpush1.msra.mxu0 %v45
    %58 = vmatprep.subr.mxu0 0.0
    %59 = vmatpush1.msra.mxu0 0.0
    %60 = vmatprep.subr.mxu0 0.0
    %61 = vmatpush1.msra.mxu0 0.0
    %62 = vmatprep.subr.mxu0 0.0
    %63 = vmatpush1.msra.mxu0 0.0
    %64 = vmatprep.subr.mxu0 0.0
    %65 = vmatpush1.msra.mxu0 0.0
    %66 = vmatprep.subr.mxu0 0.0
    %67 = vmatpush1.msra.mxu0 0.0
    %68 = vmatprep.subr.mxu0 0.0
    %69 = vmatpush1.msra.mxu0 0.0
    %70 = vmatprep.subr.mxu0 0.0
    %71 = vmatpush1.msra.mxu0 0.0
    %72 = vmatprep.subr.mxu0 0.0
    %73 = vmatpush1.msra.mxu0 0.0
    %74 = vmatprep.subr.mxu0 0.0
    %75 = vmatpush1.msra.mxu0 0.0
    %76 = vmatprep.subr.mxu0 0.0
    %77 = vmatpush1.msra.mxu0 0.0
    %78 = vmatprep.subr.mxu0 0.0
    %79 = vmatpush1.msra.mxu0 0.0
    %80 = vmatprep.subr.mxu0 0.0
    %81 = vmatpush1.msra.mxu0 0.0
    %82 = vmatprep.subr.mxu0 0.0
    %83 = vmatpush1.msra.mxu0 0.0
    %84 = vmatprep.subr.mxu0 0.0
    %85 = vmatpush1.msra.mxu0 0.0
    %86 = vmatprep.subr.mxu0 0.0
    %87 = vmatpush1.msra.mxu0 0.0
    %88 = vmatprep.subr.mxu0 0.0
    %89 = vmatpush1.msra.mxu0 0.0
    %90 = vmatprep.subr.mxu0 0.0
    %91 = vmatpush1.msra.mxu0 0.0
    %92 = vmatprep.subr.mxu0 0.0
    %93 = vmatpush1.msra.mxu0 0.0
    %94 = vmatprep.subr.mxu0 0.0
    %95 = vmatpush1.msra.mxu0 0.0
    %96 = vmatprep.subr.mxu0 0.0
    %97 = vmatpush1.msra.mxu0 0.0
    %98 = vmatprep.subr.mxu0 0.0
    %99 = vmatpush1.msra.mxu0 0.0
    %100 = vmatprep.subr.mxu0 0.0
    %101 = vmatpush1.msra.mxu0 0.0
    %102 = vmatprep.subr.mxu0 0.0
    %103 = vmatpush1.msra.mxu0 0.0
    %104 = vmatprep.subr.mxu0 0.0
    %105 = vmatpush1.msra.mxu0 0.0
    %106 = vmatprep.subr.mxu0 0.0
    %107 = vmatpush1.msra.mxu0 0.0
    %108 = vmatprep.subr.mxu0 0.0
    %109 = vmatpush1.msra.mxu0 0.0
    %110 = vmatprep.subr.mxu0 0.0
    %111 = vmatpush1.msra.mxu0 0.0
    %112 = vmatprep.subr.mxu0 0.0
    %113 = vmatpush1.msra.mxu0 0.0
    %114 = vmatprep.mubr.f32.mxu0 0.0
    %115 = vmatmul.mubr.f32.gmra.mrb[0].mxu0 %v48
    %v116 = vpop.f32.mrb[0].mxu0
    %v117 = vadd.f32 0.0, %v116
    %v118 = vpop.f32.mrb[0].mxu0
    %119 = vdwg.mxu0
    %v120 = vrot.slane %v117, 4
    %v121 = vadd.f32 %v117, %v120
    %v122 = vrot.slane %v121, 2
    %v123 = vadd.f32 %v121, %v122
    %v124 = vrot.slane %v123, 1
    %v125 = vadd.f32 %v123, %v124
    %v126 = vmul.f32 %v125, 0.125
    %v127 = vmul.f32 %v117, %v117
    %v128 = vrot.slane %v127, 4
    %v129 = vadd.f32 %v127, %v128
    %v130 = vrot.slane %v129, 2
    %v131 = vadd.f32 %v129, %v130
    %v132 = vrot.slane %v131, 1
    %v133 = vadd.f32 %v131, %v132
    %v134 = vmul.f32 %v133, 0.125
    %v135 = vmul.f32 %v126, %v126
    %v136 = vsub.f32 %v134, %v135
    %v137 = vmax.f32 %v136, 0.0
    %v138 = vadd.f32 %v137, 1e-05
    %v139 = vrsqrt.pop %v138
    %v140 = vld [vmem:[%s2] sm:$0x1]
    %v141 = vld [vmem:[%s2 + $0x1] sm:$0x1]
    %v142 = vmul.f32 %v140, %v139
    %v143 = vmul.f32 %v126, %v142
    %v144 = vsub.f32 %v141, %v143
    %v145 = vlaneseq
    %v146 = vshrl.u32 %v145, 7
    %v147 = vsub.s32 0, %v146
    %v148 = vrot.slane %v142, %v147
    %v149 = vmul.f32 %v117, %v148
    %v150 = vlaneseq
    %v151 = vshrl.u32 %v150, 7
    %v152 = vsub.s32 0, %v151
    %v153 = vrot.slane %v144, %v152
    %v154 = vadd.f32 %v149, %v153
    %v155 = vmax.f32 %v154, 0.0
    %v156 = vld [vmem:[%s3] sm:$0xff]
    %v157 = vld [vmem:[%s3 + $0x8] sm:$0xff]
    %v158 = vld [vmem:[%s3 + $0x10] sm:$0xff]
    %v159 = vld [vmem:[%s3 + $0x18] sm:$0xff]
    %v160 = vld [vmem:[%s3 + $0x20] sm:$0xff]
    %v161 = vld [vmem:[%s3 + $0x28] sm:$0xff]
    %v162 = vld [vmem:[%s3 + $0x30] sm:$0xff]
    %v163 = vld [vmem:[%s3 + $0x38] sm:$0xff]
    %v164 = vld [vmem:[%s3 + $0x40] sm:$0xff]
    %v165 = vld [vmem:[%s3 + $0x48] sm:$0xff]
    %v166 = vld [vmem:[%s3 + $0x50] sm:$0xff]
    %v167 = vld [vmem:[%s3 + $0x58] sm:$0xff]
    %v168 = vld [vmem:[%s3 + $0x60] sm:$0xff]
    %v169 = vld [vmem:[%s3 + $0x68] sm:$0xff]
    %v170 = vld [vmem:[%s3 + $0x70] sm:$0xff]
    %v171 = vld [vmem:[%s3 + $0x78] sm:$0xff]
    %172 = vmatprep.subr.mxu0 0.0
    %173 = vmatpush1.msra.mxu0 %v156
    %174 = vmatprep.subr.mxu0 0.0
    %175 = vmatpush1.msra.mxu0 %v157
    %176 = vmatprep.subr.mxu0 0.0
    %177 = vmatpush1.msra.mxu0 %v158
    %178 = vmatprep.subr.mxu0 0.0
    %179 = vmatpush1.msra.mxu0 %v159
    %180 = vmatprep.subr.mxu0 0.0
    %181 = vmatpush1.msra.mxu0 %v160
    %182 = vmatprep.subr.mxu0 0.0
    %183 = vmatpush1.msra.mxu0 %v161
    %184 = vmatprep.subr.mxu0 0.0
    %185 = vmatpush1.msra.mxu0 %v162
    %186 = vmatprep.subr.mxu0 0.0
    %187 = vmatpush1.msra.mxu0 %v163
    %188 = vmatprep.subr.mxu0 0.0
    %189 = vmatpush1.msra.mxu0 %v164
    %190 = vmatprep.subr.mxu0 0.0
    %191 = vmatpush1.msra.mxu0 %v165
    %192 = vmatprep.subr.mxu0 0.0
    %193 = vmatpush1.msra.mxu0 %v166
    %194 = vmatprep.subr.mxu0 0.0
    %195 = vmatpush1.msra.mxu0 %v167
    %196 = vmatprep.subr.mxu0 0.0
    %197 = vmatpush1.msra.mxu0 %v168
    %198 = vmatprep.subr.mxu0 0.0
    %199 = vmatpush1.msra.mxu0 %v169
    %200 = vmatprep.subr.mxu0 0.0
    %201 = vmatpush1.msra.mxu0 %v170
    %202 = vmatprep.subr.mxu0 0.0
    %203 = vmatpush1.msra.mxu0 %v171
    %204 = vmatprep.subr.mxu0 0.0
    %205 = vmatpush1.msra.mxu0 0.0
    %206 = vmatprep.subr.mxu0 0.0
    %207 = vmatpush1.msra.mxu0 0.0
    %208 = vmatprep.subr.mxu0 0.0
    %209 = vmatpush1.msra.mxu0 0.0
    %210 = vmatprep.subr.mxu0 0.0
    %211 = vmatpush1.msra.mxu0 0.0
    %212 = vmatprep.subr.mxu0 0.0
    %213 = vmatpush1.msra.mxu0 0.0
    %214 = vmatprep.subr.mxu0 0.0
    %215 = vmatpush1.msra.mxu0 0.0
    %216 = vmatprep.subr.mxu0 0.0
    %217 = vmatpush1.msra.mxu0 0.0
    %218 = vmatprep.subr.mxu0 0.0
    %219 = vmatpush1.msra.mxu0 0.0
    %220 = vmatprep.subr.mxu0 0.0
    %221 = vmatpush1.msra.mxu0 0.0
    %222 = vmatprep.subr.mxu0 0.0
    %223 = vmatpush1.msra.mxu0 0.0
    %224 = vmatprep.subr.mxu0 0.0
    %225 = vmatpush1.msra.mxu0 0.0
    %226 = vmatprep.subr.mxu0 0.0
    %227 = vmatpush1.msra.mxu0 0.0
    %228 = vmatprep.subr.mxu0 0.0
    %229 = vmatpush1.msra.mxu0 0.0
    %230 = vmatprep.subr.mxu0 0.0
    %231 = vmatpush1.msra.mxu0 0.0
    %232 = vmatprep.subr.mxu0 0.0
    %233 = vmatpush1.msra.mxu0 0.0
    %234 = vmatprep.subr.mxu0 0.0
    %235 = vmatpush1.msra.mxu0 0.0
    %236 = vmatprep.mubr.f32.mxu0 0.0
    %237 = vmatmul.mubr.f32.gmra.mrb[0].mxu0 %v155
    %v238 = vpop.f32.mrb[0].mxu0
    %v239 = vadd.f32 0.0, %v238
    %v240 = vpop.f32.mrb[0].mxu0
    %241 = vdwg.mxu0
    %v242 = vrot.slane %v239, 4
    %v243 = vadd.f32 %v239, %v242
    %v244 = vrot.slane %v243, 2
    %v245 = vadd.f32 %v243, %v244
    %v246 = vrot.slane %v245, 1
    %v247 = vadd.f32 %v245, %v246
    %v248 = vmul.f32 %v247, 0.125
    %v249 = vmul.f32 %v239, %v239
    %v250 = vrot.slane %v249, 4
    %v251 = vadd.f32 %v249, %v250
    %v252 = vrot.slane %v251, 2
    %v253 = vadd.f32 %v251, %v252
    %v254 = vrot.slane %v253, 1
    %v255 = vadd.f32 %v253, %v254
    %v256 = vmul.f32 %v255, 0.125
    %v257 = vmul.f32 %v248, %v248
    %v258 = vsub.f32 %v256, %v257
    %v259 = vmax.f32 %v258, 0.0
    %v260 = vadd.f32 %v259, 1e-05
    %v261 = vrsqrt.pop %v260
    %v262 = vld [vmem:[%s4] sm:$0x1]
    %v263 = vld [vmem:[%s4 + $0x1] sm:$0x1]
    %v264 = vmul.f32 %v262, %v261
    %v265 = vmul.f32 %v248, %v264
    %v266 = vsub.f32 %v263, %v265
    %v267 = vlaneseq
    %v268 = vshrl.u32 %v267, 7
    %v269 = vsub.s32 0, %v268
    %v270 = vrot.slane %v264, %v269
    %v271 = vmul.f32 %v239, %v270
    %v272 = vlaneseq
    %v273 = vshrl.u32 %v272, 7
    %v274 = vsub.s32 0, %v273
    %v275 = vrot.slane %v266, %v274
    %v276 = vadd.f32 %v271, %v275
    %v277 = vmax.f32 %v276, 0.0
    %v278 = vld [vmem:[%s5] sm:$0xff]
    %v279 = vld [vmem:[%s5 + $0x8] sm:$0xff]
    %v280 = vld [vmem:[%s5 + $0x10] sm:$0xff]
    %v281 = vld [vmem:[%s5 + $0x18] sm:$0xff]
    %v282 = vld [vmem:[%s5 + $0x20] sm:$0xff]
    %v283 = vld [vmem:[%s5 + $0x28] sm:$0xff]
    %v284 = vld [vmem:[%s5 + $0x30] sm:$0xff]
    %v285 = vld [vmem:[%s5 + $0x38] sm:$0xff]
    %v286 = vld [vmem:[%s5 + $0x40] sm:$0xff]
    %v287 = vld [vmem:[%s5 + $0x48] sm:$0xff]
    %v288 = vld [vmem:[%s5 + $0x50] sm:$0xff]
    %v289 = vld [vmem:[%s5 + $0x58] sm:$0xff]
    %v290 = vld [vmem:[%s5 + $0x60] sm:$0xff]
    %v291 = vld [vmem:[%s5 + $0x68] sm:$0xff]
    %v292 = vld [vmem:[%s5 + $0x70] sm:$0xff]
    %v293 = vld [vmem:[%s5 + $0x78] sm:$0xff]
    %294 = vmatprep.subr.mxu0 0.0
    %295 = vmatpush1.msra.mxu0 %v278
    %296 = vmatprep.subr.mxu0 0.0
    %297 = vmatpush1.msra.mxu0 %v279
    %298 = vmatprep.subr.mxu0 0.0
    %299 = vmatpush1.msra.mxu0 %v280
    %300 = vmatprep.subr.mxu0 0.0
    %301 = vmatpush1.msra.mxu0 %v281
    %302 = vmatprep.subr.mxu0 0.0
    %303 = vmatpush1.msra.mxu0 %v282
    %304 = vmatprep.subr.mxu0 0.0
    %305 = vmatpush1.msra.mxu0 %v283
    %306 = vmatprep.subr.mxu0 0.0
    %307 = vmatpush1.msra.mxu0 %v284
    %308 = vmatprep.subr.mxu0 0.0
    %309 = vmatpush1.msra.mxu0 %v285
    %310 = vmatprep.subr.mxu0 0.0
    %311 = vmatpush1.msra.mxu0 %v286
    %312 = vmatprep.subr.mxu0 0.0
    %313 = vmatpush1.msra.mxu0 %v287
    %314 = vmatprep.subr.mxu0 0.0
    %315 = vmatpush1.msra.mxu0 %v288
    %316 = vmatprep.subr.mxu0 0.0
    %317 = vmatpush1.msra.mxu0 %v289
    %318 = vmatprep.subr.mxu0 0.0
    %319 = vmatpush1.msra.mxu0 %v290
    %320 = vmatprep.subr.mxu0 0.0
    %321 = vmatpush1.msra.mxu0 %v291
    %322 = vmatprep.subr.mxu0 0.0
    %323 = vmatpush1.msra.mxu0 %v292
    %324 = vmatprep.subr.mxu0 0.0
    %325 = vmatpush1.msra.mxu0 %v293
    %326 = vmatprep.subr.mxu0 0.0
    %327 = vmatpush1.msra.mxu0 0.0
    %328 = vmatprep.subr.mxu0 0.0
    %329 = vmatpush1.msra.mxu0 0.0
    %330 = vmatprep.subr.mxu0 0.0
    %331 = vmatpush1.msra.mxu0 0.0
    %332 = vmatprep.subr.mxu0 0.0
    %333 = vmatpush1.msra.mxu0 0.0
    %334 = vmatprep.subr.mxu0 0.0
    %335 = vmatpush1.msra.mxu0 0.0
    %336 = vmatprep.subr.mxu0 0.0
    %337 = vmatpush1.msra.mxu0 0.0
    %338 = vmatprep.subr.mxu0 0.0
    %339 = vmatpush1.msra.mxu0 0.0
    %340 = vmatprep.subr.mxu0 0.0
    %341 = vmatpush1.msra.mxu0 0.0
    %342 = vmatprep.subr.mxu0 0.0
    %343 = vmatpush1.msra.mxu0 0.0
    %344 = vmatprep.subr.mxu0 0.0
    %345 = vmatpush1.msra.mxu0 0.0
    %346 = vmatprep.subr.mxu0 0.0
    %347 = vmatpush1.msra.mxu0 0.0
    %348 = vmatprep.subr.mxu0 0.0
    %349 = vmatpush1.msra.mxu0 0.0
    %350 = vmatprep.subr.mxu0 0.0
    %351 = vmatpush1.msra.mxu0 0.0
    %352 = vmatprep.subr.mxu0 0.0
    %353 = vmatpush1.msra.mxu0 0.0
    %354 = vmatprep.subr.mxu0 0.0
    %355 = vmatpush1.msra.mxu0 0.0
    %356 = vmatprep.subr.mxu0 0.0
    %357 = vmatpush1.msra.mxu0 0.0
    %358 = vmatprep.mubr.f32.mxu0 0.0
    %359 = vmatmul.mubr.f32.gmra.mrb[0].mxu0 %v277
    %v360 = vpop.f32.mrb[0].mxu0
    %v361 = vadd.f32 0.0, %v360
    %v362 = vpop.f32.mrb[0].mxu0
    %363 = vdwg.mxu0
    %vm364 = vcmask 130048
    %v365 = vsel %vm364, %v361, 0.0
    %v366 = vrot.slane %v365, 4
    %v367 = vadd.f32 %v365, %v366
    %v368 = vrot.slane %v367, 2
    %v369 = vadd.f32 %v367, %v368
    %v370 = vrot.slane %v369, 1
    %v371 = vadd.f32 %v369, %v370
    %v372 = vmul.f32 %v371, 0.125
    %v373 = vmul.f32 %v361, %v361
    %v374 = vsel %vm364, %v373, 0.0
    %v375 = vrot.slane %v374, 4
    %v376 = vadd.f32 %v374, %v375
    %v377 = vrot.slane %v376, 2
    %v378 = vadd.f32 %v376, %v377
    %v379 = vrot.slane %v378, 1
    %v380 = vadd.f32 %v378, %v379
    %v381 = vmul.f32 %v380, 0.125
    %v382 = vmul.f32 %v372, %v372
    %v383 = vsub.f32 %v381, %v382
    %v384 = vmax.f32 %v383, 0.0
    %v385 = vadd.f32 %v384, 1e-05
    %v386 = vrsqrt.pop %v385
    %v387 = vld [vmem:[%s6] sm:$0x1]
    %v388 = vld [vmem:[%s6 + $0x1] sm:$0x1]
    %v389 = vmul.f32 %v387, %v386
    %v390 = vmul.f32 %v372, %v389
    %v391 = vsub.f32 %v388, %v390
    %v392 = vlaneseq
    %v393 = vshrl.u32 %v392, 7
    %v394 = vsub.s32 0, %v393
    %v395 = vrot.slane %v389, %v394
    %v396 = vmul.f32 %v361, %v395
    %v397 = vlaneseq
    %v398 = vshrl.u32 %v397, 7
    %v399 = vsub.s32 0, %v398
    %v400 = vrot.slane %v391, %v399
    %v401 = vadd.f32 %v396, %v400
    %v402 = vmax.f32 %v401, 0.0
    %403 = vst.msk [vmem:[#allocation5] sm:$0xff] %vm364, %v402
    // Predicated region
    $region34: #{linear_net_forward.1} parent=1 // pred_check
      _
    $region35: #{linear_net_forward.1} parent=1 // pred_check_branch
      %405 = sbr.rel (0) target = $region37
    $region36: #{linear_net_forward.1} parent=1 // pred_region
      %s407 = ssub.s32 128, 128
      %408 = vsyncadd [#allocation4], %s407
      %s410 = sshll.u32 [#allocation5], 4
      %s411 = int_to_ptr.vmem [resolvable:$true] %s410
      %413 = dma.vmem_to_hbm [thread:$0]  %s411, 128, %s7, [#allocation4]
    $region37: #{linear_net_forward.1} parent=1 // pred_fallthru
      _
    // Predicated region
    $region38: #{linear_net_forward.1} parent=1 // pred_check
      _
    $region39: #{linear_net_forward.1} parent=1 // pred_check_branch
      %415 = sbr.rel (0) target = $region41
    $region40: #{linear_net_forward.1} parent=1 // pred_region
      %416 = dma.done [#allocation4], 128
    $region41: #{linear_net_forward.1} parent=1 // pred_fallthru
      _
    %417 = vsyncpa [#allocation3], 1
    %418 = vsyncpa [#allocation4], 1

</llo_original>
